<compile_context>
chip_gen: v6e
topology: v6e:2x2x1
jax: 0.10.0
libtpu: 0.0.40
codegen_flags: <defaults>
</compile_context>

<pallas_src>
import jax
import jax.numpy as jnp
from jax import lax
from jax.experimental import pallas as pl
from jax.experimental.pallas import tpu as pltpu

BATCH_SIZE = 16
_LANES = 128          # token ids per row (vreg lane width)
_ROW_ALIGN = 8        # sublane alignment for the second-minor block dim


def _cdiv(a, b):
    return -(-a // b)


def _round_up(a, b):
    return _cdiv(a, b) * b


def _text_sentiment_kernel(ids_ref, m_ref, bias_ref, out_ref, hist_ref):
    """Histogram-accumulate one (tile_r, 128) id block of one pooling window.

    ids_ref:  (tile_r, 128) int32   token ids of window b, chunk k (-1 = padding)
    m_ref:    (V, C) f32            (emb_table @ fc_weight.T) / c, vocab-padded (resident)
    bias_ref: (1, C) f32            (resident)
    out_ref:  (1, C) f32            logits for window b (written at last chunk)
    hist_ref: (V, 128) f32 scratch  lane-spread token-histogram accumulator
    """
    k = pl.program_id(1)
    V = hist_ref.shape[0]
    tile_r = ids_ref.shape[0]

    @pl.when(k == 0)
    def _init():
        hist_ref[...] = jnp.zeros_like(hist_ref)

    # vocab-bin index along the sublane axis; loop-invariant.
    bins = lax.broadcasted_iota(jnp.int32, (V, _LANES), 0)

    def row_body(r, h):
        row = ids_ref[pl.ds(r, 1), :]                            # (1, 128) int32
        onehot = jnp.broadcast_to(row, (V, _LANES)) == bins       # (V, 128) bool
        return h + onehot.astype(jnp.float32)

    # Hot loop: pure VPU compare+accumulate, 128 tokens per iteration.
    hist_ref[...] = lax.fori_loop(0, tile_r, row_body, hist_ref[...], unroll=8)

    @pl.when(k == pl.num_programs(1) - 1)
    def _finalize():
        hist = jnp.sum(hist_ref[...], axis=1, keepdims=True)          # (V, 1)
        logits = jnp.sum(hist * m_ref[...], axis=0, keepdims=True)    # (1, C)
        out_ref[...] = logits + bias_ref[...]


def _pick_vmem_limit(block_bytes):
    """Generation-aware scoped-VMEM limit (review: don't hardcode 128 MiB)."""
    cap = 64 * 1024 * 1024                       # conservative default (v7x)
    try:
        cap = int(getattr(pltpu.get_tpu_info(), "vmem_capacity_bytes", cap))
    except Exception:
        pass
    want = 4 * block_bytes + 16 * 1024 * 1024
    return int(max(8 * 1024 * 1024, min(want, cap // 2)))


def text_sentiment_forward(text, emb_table, fc_weight, fc_bias, *, tile_rows=512):
    """Pure-JAX glue (layout, tiny weight folding) + Pallas hot path.

    text:       (m,) int32 token ids
    emb_table:  (vocab_size, embed_dim) f32
    fc_weight:  (num_class, embed_dim) f32   (PyTorch nn.Linear layout)
    fc_bias:    (num_class,) f32
    returns:    (BATCH_SIZE, num_class) f32
    """
    B = BATCH_SIZE
    m = text.shape[0]
    vocab, _embed_dim = emb_table.shape
    num_class = fc_weight.shape[0]

    c = m // B
    if c == 0:
        raise ValueError(f"need at least {B} tokens, got {m}")

    # --- token-id layout (B, rows_pad, 128); pad id = -1 matches no vocab bin.
    rows = _cdiv(c, _LANES)
    tile_r = min(_round_up(rows, _ROW_ALIGN),
                 max(_ROW_ALIGN, (tile_rows // _ROW_ALIGN) * _ROW_ALIGN))
    rows_pad = _round_up(rows, tile_r)
    c_pad = rows_pad * _LANES

    ids = text[: B * c].astype(jnp.int32).reshape(B, c)
    if c_pad != c:
        ids = jnp.pad(ids, ((0, 0), (0, c_pad - c)), constant_values=-1)
    ids = ids.reshape(B, rows_pad, _LANES)

    # --- fold avg-pool 1/c, embedding table and FC weight into one tiny
    #     (V, num_class) operand; HIGHEST precision keeps it exact f32.
    V = _round_up(max(vocab, _ROW_ALIGN), _ROW_ALIGN)
    table_pad = jnp.pad(emb_table.astype(jnp.float32), ((0, V - vocab), (0, 0)))
    m_mat = jnp.dot(table_pad, fc_weight.astype(jnp.float32).T,
                    precision=lax.Precision.HIGHEST) / float(c)
    bias2d = fc_bias.astype(jnp.float32).reshape(1, num_class)

    n_chunks = rows_pad // tile_r
    grid = (B, n_chunks)
    block_bytes = tile_r * _LANES * 4

    out = pl.pallas_call(
        _text_sentiment_kernel,
        out_shape=jax.ShapeDtypeStruct((B, 1, num_class), jnp.float32),
        grid=grid,
        in_specs=[
            # one contiguous (tile_r, 128) int32 DMA per step; window dim squeezed
            pl.BlockSpec((None, tile_r, _LANES), lambda b, k: (b, k, 0)),
            pl.BlockSpec((V, num_class), lambda b, k: (0, 0)),      # resident
            pl.BlockSpec((1, num_class), lambda b, k: (0, 0)),      # resident
        ],
        out_specs=pl.BlockSpec((None, 1, num_class), lambda b, k: (b, 0, 0)),
        scratch_shapes=[pltpu.VMEM((V, _LANES), jnp.float32)],
        compiler_params=pltpu.CompilerParams(
            dimension_semantics=("parallel", "arbitrary"),   # windows || , chunks = reduction
            vmem_limit_bytes=_pick_vmem_limit(block_bytes)),
    )(ids, m_mat, bias2d)
    return out.reshape(B, num_class)


def _reference_forward(text, emb_table, fc_weight, fc_bias):
    """Pure-JAX reference mirroring the PyTorch forward exactly (f32, HIGHEST)."""
    m = text.shape[0]
    c = m // BATCH_SIZE
    embedded = jnp.take(emb_table, text[: BATCH_SIZE * c], axis=0)   # (B*c, D)
    pooled = embedded.reshape(BATCH_SIZE, c, -1).mean(axis=1)        # (B, D)
    return jnp.dot(pooled, fc_weight.T,
                   precision=lax.Precision.HIGHEST) + fc_bias


if __name__ == "__main__":
    # Deterministic, small config consistent with the module's __init__.
    vocab_size, embed_dim, num_class = 100, 32, 4

    key = jax.random.PRNGKey(0)
    k_emb, k_fcw, k_txt = jax.random.split(key, 3)

    initrange = 0.5
    emb_table = jax.random.uniform(
        k_emb, (vocab_size, embed_dim), jnp.float32, -initrange, initrange)
    fc_weight = jax.random.uniform(
        k_fcw, (num_class, embed_dim), jnp.float32, -initrange, initrange)
    fc_bias = jnp.zeros((num_class,), jnp.float32)

    # (c, tile_rows) cases: tiny window / moderate window / row padding with a
    # single chunk / multi-chunk accumulation across grid steps.
    cases = [(8, 512), (100, 512), (1200, 512), (1200, 8), (2600, 8)]
    for c_test, tile_rows in cases:
        m = BATCH_SIZE * c_test + 3        # extra tokens exercise [:B*c] truncation
        text = jax.random.randint(
            jax.random.fold_in(k_txt, c_test), (m,), 0, vocab_size, dtype=jnp.int32)

        out = text_sentiment_forward(text, emb_table, fc_weight, fc_bias,
                                     tile_rows=tile_rows)
        out = jax.block_until_ready(out)

        ref = _reference_forward(text, emb_table, fc_weight, fc_bias)
        assert out.shape == (BATCH_SIZE, num_class)
        assert jnp.allclose(out, ref, atol=2e-5, rtol=2e-5), (c_test, out, ref)

    print("KERNEL_OK")
</pallas_src>

<mosaic_0001>
module attributes {stable_mosaic.version = 11 : i64} {
  func.func @_text_sentiment_kernel(%arg0: i32, %arg1: i32, %arg2: memref<1x8x128xi32, #tpu.memory_space<vmem>>, %arg3: memref<104x4xf32, #tpu.memory_space<vmem>>, %arg4: memref<1x4xf32, #tpu.memory_space<vmem>>, %arg5: memref<1x1x4xf32, #tpu.memory_space<vmem>>, %arg6: memref<104x128xf32, #tpu.memory_space<vmem>>) attributes {dimension_semantics = [#tpu.dimension_semantics<parallel>, #tpu.dimension_semantics<arbitrary>], iteration_bounds = array<i64: 16, 1>, scalar_prefetch = 0 : i64, scratch_operands = 1 : i64, tpu.core_type = #tpu.core_type<tc>, window_params = [{transform_indices = @transform_0, window_bounds = array<i64: 1, 8, 128>}, {pipeline_mode = #tpu.pipeline_mode<synchronous>, transform_indices = @transform_1, window_bounds = array<i64: 104, 4>}, {pipeline_mode = #tpu.pipeline_mode<synchronous>, transform_indices = @transform_2, window_bounds = array<i64: 1, 4>}, {transform_indices = @transform_3, window_bounds = array<i64: 1, 1, 4>}]} {
    %c0_i32 = arith.constant 0 : i32
    %0 = arith.cmpi eq, %arg1, %c0_i32 : i32
    %1 = arith.extui %0 : i1 to i32
    %c0_i32_0 = arith.constant 0 : i32
    %2 = arith.cmpi ne, %1, %c0_i32_0 : i32
    scf.if %2 {
      %cst = arith.constant 0.000000e+00 : f32
      %81 = vector.broadcast %cst : f32 to vector<104x128xf32>
      %c0_23 = arith.constant 0 : index
      %c0_24 = arith.constant 0 : index
      %82 = vector.load %arg6[%c0_23, %c0_24] : memref<104x128xf32, #tpu.memory_space<vmem>>, vector<104x128xf32>
      tpu.vector_store %arg6[%c0_23, %c0_24], %81 {strides = array<i32>} : memref<104x128xf32, #tpu.memory_space<vmem>>, vector<104x128xf32>,
    } else {
    }
    %3 = tpu.iota {dimensions = array<i32: 0>} : vector<104x128xi32>
    %c0 = arith.constant 0 : index
    %c0_1 = arith.constant 0 : index
    %4 = vector.load %arg6[%c0, %c0_1] : memref<104x128xf32, #tpu.memory_space<vmem>>, vector<104x128xf32>
    %c0_i32_2 = arith.constant 0 : i32
    %c0_3 = arith.constant 0 : index
    %5 = arith.index_cast %c0_i32_2 : i32 to index
    %c0_4 = arith.constant 0 : index
    %6 = vector.load %arg2[%c0_3, %5, %c0_4] : memref<1x8x128xi32, #tpu.memory_space<vmem>>, vector<1x1x128xi32>
    %7 = vector.shape_cast %6 : vector<1x1x128xi32> to vector<1x128xi32>
    %8 = vector.shape_cast %7 : vector<1x128xi32> to vector<1x128xi32>
    %9 = vector.broadcast %8 : vector<1x128xi32> to vector<104x128xi32>
    %10 = arith.cmpi eq, %9, %3 : vector<104x128xi32>
    %11 = arith.extui %10 : vector<104x128xi1> to vector<104x128xi32>
    %12 = arith.sitofp %11 : vector<104x128xi32> to vector<104x128xf32>
    %13 = arith.addf %4, %12 : vector<104x128xf32>
    %c1_i32 = arith.constant 1 : i32
    %c0_5 = arith.constant 0 : index
    %14 = arith.index_cast %c1_i32 : i32 to index
    %c0_6 = arith.constant 0 : index
    %15 = vector.load %arg2[%c0_5, %14, %c0_6] : memref<1x8x128xi32, #tpu.memory_space<vmem>>, vector<1x1x128xi32>
    %16 = vector.shape_cast %15 : vector<1x1x128xi32> to vector<1x128xi32>
    %17 = vector.shape_cast %16 : vector<1x128xi32> to vector<1x128xi32>
    %18 = vector.broadcast %17 : vector<1x128xi32> to vector<104x128xi32>
    %19 = arith.cmpi eq, %18, %3 : vector<104x128xi32>
    %20 = arith.extui %19 : vector<104x128xi1> to vector<104x128xi32>
    %21 = arith.sitofp %20 : vector<104x128xi32> to vector<104x128xf32>
    %22 = arith.addf %13, %21 : vector<104x128xf32>
    %c2_i32 = arith.constant 2 : i32
    %c0_7 = arith.constant 0 : index
    %23 = arith.index_cast %c2_i32 : i32 to index
    %c0_8 = arith.constant 0 : index
    %24 = vector.load %arg2[%c0_7, %23, %c0_8] : memref<1x8x128xi32, #tpu.memory_space<vmem>>, vector<1x1x128xi32>
    %25 = vector.shape_cast %24 : vector<1x1x128xi32> to vector<1x128xi32>
    %26 = vector.shape_cast %25 : vector<1x128xi32> to vector<1x128xi32>
    %27 = vector.broadcast %26 : vector<1x128xi32> to vector<104x128xi32>
    %28 = arith.cmpi eq, %27, %3 : vector<104x128xi32>
    %29 = arith.extui %28 : vector<104x128xi1> to vector<104x128xi32>
    %30 = arith.sitofp %29 : vector<104x128xi32> to vector<104x128xf32>
    %31 = arith.addf %22, %30 : vector<104x128xf32>
    %c3_i32 = arith.constant 3 : i32
    %c0_9 = arith.constant 0 : index
    %32 = arith.index_cast %c3_i32 : i32 to index
    %c0_10 = arith.constant 0 : index
    %33 = vector.load %arg2[%c0_9, %32, %c0_10] : memref<1x8x128xi32, #tpu.memory_space<vmem>>, vector<1x1x128xi32>
    %34 = vector.shape_cast %33 : vector<1x1x128xi32> to vector<1x128xi32>
    %35 = vector.shape_cast %34 : vector<1x128xi32> to vector<1x128xi32>
    %36 = vector.broadcast %35 : vector<1x128xi32> to vector<104x128xi32>
    %37 = arith.cmpi eq, %36, %3 : vector<104x128xi32>
    %38 = arith.extui %37 : vector<104x128xi1> to vector<104x128xi32>
    %39 = arith.sitofp %38 : vector<104x128xi32> to vector<104x128xf32>
    %40 = arith.addf %31, %39 : vector<104x128xf32>
    %c4_i32 = arith.constant 4 : i32
    %c0_11 = arith.constant 0 : index
    %41 = arith.index_cast %c4_i32 : i32 to index
    %c0_12 = arith.constant 0 : index
    %42 = vector.load %arg2[%c0_11, %41, %c0_12] : memref<1x8x128xi32, #tpu.memory_space<vmem>>, vector<1x1x128xi32>
    %43 = vector.shape_cast %42 : vector<1x1x128xi32> to vector<1x128xi32>
    %44 = vector.shape_cast %43 : vector<1x128xi32> to vector<1x128xi32>
    %45 = vector.broadcast %44 : vector<1x128xi32> to vector<104x128xi32>
    %46 = arith.cmpi eq, %45, %3 : vector<104x128xi32>
    %47 = arith.extui %46 : vector<104x128xi1> to vector<104x128xi32>
    %48 = arith.sitofp %47 : vector<104x128xi32> to vector<104x128xf32>
    %49 = arith.addf %40, %48 : vector<104x128xf32>
    %c5_i32 = arith.constant 5 : i32
    %c0_13 = arith.constant 0 : index
    %50 = arith.index_cast %c5_i32 : i32 to index
    %c0_14 = arith.constant 0 : index
    %51 = vector.load %arg2[%c0_13, %50, %c0_14] : memref<1x8x128xi32, #tpu.memory_space<vmem>>, vector<1x1x128xi32>
    %52 = vector.shape_cast %51 : vector<1x1x128xi32> to vector<1x128xi32>
    %53 = vector.shape_cast %52 : vector<1x128xi32> to vector<1x128xi32>
    %54 = vector.broadcast %53 : vector<1x128xi32> to vector<104x128xi32>
    %55 = arith.cmpi eq, %54, %3 : vector<104x128xi32>
    %56 = arith.extui %55 : vector<104x128xi1> to vector<104x128xi32>
    %57 = arith.sitofp %56 : vector<104x128xi32> to vector<104x128xf32>
    %58 = arith.addf %49, %57 : vector<104x128xf32>
    %c6_i32 = arith.constant 6 : i32
    %c0_15 = arith.constant 0 : index
    %59 = arith.index_cast %c6_i32 : i32 to index
    %c0_16 = arith.constant 0 : index
    %60 = vector.load %arg2[%c0_15, %59, %c0_16] : memref<1x8x128xi32, #tpu.memory_space<vmem>>, vector<1x1x128xi32>
    %61 = vector.shape_cast %60 : vector<1x1x128xi32> to vector<1x128xi32>
    %62 = vector.shape_cast %61 : vector<1x128xi32> to vector<1x128xi32>
    %63 = vector.broadcast %62 : vector<1x128xi32> to vector<104x128xi32>
    %64 = arith.cmpi eq, %63, %3 : vector<104x128xi32>
    %65 = arith.extui %64 : vector<104x128xi1> to vector<104x128xi32>
    %66 = arith.sitofp %65 : vector<104x128xi32> to vector<104x128xf32>
    %67 = arith.addf %58, %66 : vector<104x128xf32>
    %c7_i32 = arith.constant 7 : i32
    %c0_17 = arith.constant 0 : index
    %68 = arith.index_cast %c7_i32 : i32 to index
    %c0_18 = arith.constant 0 : index
    %69 = vector.load %arg2[%c0_17, %68, %c0_18] : memref<1x8x128xi32, #tpu.memory_space<vmem>>, vector<1x1x128xi32>
    %70 = vector.shape_cast %69 : vector<1x1x128xi32> to vector<1x128xi32>
    %71 = vector.shape_cast %70 : vector<1x128xi32> to vector<1x128xi32>
    %72 = vector.broadcast %71 : vector<1x128xi32> to vector<104x128xi32>
    %73 = arith.cmpi eq, %72, %3 : vector<104x128xi32>
    %74 = arith.extui %73 : vector<104x128xi1> to vector<104x128xi32>
    %75 = arith.sitofp %74 : vector<104x128xi32> to vector<104x128xf32>
    %76 = arith.addf %67, %75 : vector<104x128xf32>
    %c8_i32 = arith.constant 8 : i32
    %c0_19 = arith.constant 0 : index
    %c0_20 = arith.constant 0 : index
    %77 = vector.load %arg6[%c0_19, %c0_20] : memref<104x128xf32, #tpu.memory_space<vmem>>, vector<104x128xf32>
    tpu.vector_store %arg6[%c0_19, %c0_20], %76 {strides = array<i32>} : memref<104x128xf32, #tpu.memory_space<vmem>>, vector<104x128xf32>,
    %c0_i32_21 = arith.constant 0 : i32
    %78 = arith.cmpi eq, %arg1, %c0_i32_21 : i32
    %79 = arith.extui %78 : i1 to i32
    %c0_i32_22 = arith.constant 0 : i32
    %80 = arith.cmpi ne, %79, %c0_i32_22 : i32
    scf.if %80 {
      %c0_23 = arith.constant 0 : index
      %c0_24 = arith.constant 0 : index
      %81 = vector.load %arg6[%c0_23, %c0_24] : memref<104x128xf32, #tpu.memory_space<vmem>>, vector<104x128xf32>
      %cst = arith.constant dense<0.000000e+00> : vector<104xf32>
      %82 = vector.multi_reduction <add>, %81, %cst [1] : vector<104x128xf32> to vector<104xf32>
      %83 = vector.shape_cast %82 : vector<104xf32> to vector<104x1xf32>
      %c0_25 = arith.constant 0 : index
      %c0_26 = arith.constant 0 : index
      %84 = vector.load %arg3[%c0_25, %c0_26] : memref<104x4xf32, #tpu.memory_space<vmem>>, vector<104x4xf32>
      %85 = vector.broadcast %83 : vector<104x1xf32> to vector<104x4xf32>
      %86 = arith.mulf %85, %84 : vector<104x4xf32>
      %cst_27 = arith.constant dense<0.000000e+00> : vector<4xf32>
      %87 = vector.multi_reduction <add>, %86, %cst_27 [0] : vector<104x4xf32> to vector<4xf32>
      %88 = vector.shape_cast %87 : vector<4xf32> to vector<1x4xf32>
      %c0_28 = arith.constant 0 : index
      %c0_29 = arith.constant 0 : index
      %89 = vector.load %arg4[%c0_28, %c0_29] : memref<1x4xf32, #tpu.memory_space<vmem>>, vector<1x4xf32>
      %90 = arith.addf %88, %89 : vector<1x4xf32>
      %c0_30 = arith.constant 0 : index
      %c0_31 = arith.constant 0 : index
      %c0_32 = arith.constant 0 : index
      %91 = vector.load %arg5[%c0_30, %c0_31, %c0_32] : memref<1x1x4xf32, #tpu.memory_space<vmem>>, vector<1x1x4xf32>
      %92 = vector.shape_cast %91 : vector<1x1x4xf32> to vector<1x4xf32>
      %93 = vector.shape_cast %90 : vector<1x4xf32> to vector<1x1x4xf32>
      tpu.vector_store %arg5[%c0_30, %c0_31, %c0_32], %93 {strides = array<i32>} : memref<1x1x4xf32, #tpu.memory_space<vmem>>, vector<1x1x4xf32>,
    } else {
    }
    return
  }
  func.func @transform_0(%arg0: i32, %arg1: i32) -> (i32, i32, i32) {
    %c0_i32 = arith.constant 0 : i32
    %c0_i32_0 = arith.constant 0 : i32
    return %arg0, %arg1, %c0_i32 : i32, i32, i32
  }
  func.func @transform_1(%arg0: i32, %arg1: i32) -> (i32, i32) {
    %c0_i32 = arith.constant 0 : i32
    %c0_i32_0 = arith.constant 0 : i32
    %c0_i32_1 = arith.constant 0 : i32
    return %c0_i32, %c0_i32_0 : i32, i32
  }
  func.func @transform_2(%arg0: i32, %arg1: i32) -> (i32, i32) {
    %c0_i32 = arith.constant 0 : i32
    %c0_i32_0 = arith.constant 0 : i32
    %c0_i32_1 = arith.constant 0 : i32
    return %c0_i32, %c0_i32_0 : i32, i32
  }
  func.func @transform_3(%arg0: i32, %arg1: i32) -> (i32, i32, i32) {
    %c0_i32 = arith.constant 0 : i32
    %c0_i32_0 = arith.constant 0 : i32
    %c0_i32_1 = arith.constant 0 : i32
    return %arg0, %c0_i32, %c0_i32_0 : i32, i32, i32
  }
}

</mosaic_0001>

<llo_original>
// kernel: tpu_custom_call.1
$region0: #{tpu_custom_call.1}
  #allocation0 [shape = 'u32[]', space=smem, size = 0x4, offset = 0x4, fixed_abs, tag = 'smem constant byte address 0x4 - core index']
  #allocation1 [shape = 'u32[144,128]{1,0:T(1,128)}', space=vmem, size = 0x12000, scoped, tag = 'internal scratch']
  #allocation2 [shape = 'f32[104,128]{1,0:T(8,128)}', space=vmem, size = 0xd000, scoped, tag = 'scratch operand']
  %s0 = inlined_call_operand.hbm [shape: s32[16,8,128], index: 0, kind: input, shape index: {}]
  %s1 = inlined_call_operand.vmem [shape: f32[104,4], index: 1, kind: input, shape index: {}]
  %s2 = inlined_call_operand.vmem [shape: f32[1,4], index: 2, kind: input, shape index: {}]
  %s3 = inlined_call_operand.vmem [shape: f32[16,1,4], index: 3, kind: output, shape index: {}]
  %s4 = sld [smem:[#allocation0]]
  $region57: #{tpu_custom_call.1} parent=0
    _
  %s6 = ssub.s32 1, %s4
  %s7 = scalar_select 0, %s6, %s4
  $region1: #{tpu_custom_call.1} parent=0
    #allocation3 [shape = 'u8[8192]{0}', space=vmem, size = 0x2000, scoped, tag = 'input window, operand 0']
    #allocation4 [shape = 's32[2]{0}', space=sflag, size = 0x8, scoped, tag = 'scoped memory for tpu_custom_call.1']
    %8 = vsyncpa [#allocation4], 0
    %s9 = scalar_lea.sflag [#allocation4], 1
    %10 = vsyncpa %s9, 0
    loop: start=0, step=1, limit=18
    $region2: #{tpu_custom_call.1} parent=1 // loop_pre_header
      _
    $region3: #{tpu_custom_call.1} parent=1 // loop_header
      %s12 = sphi 0, %s16
      %p13 = scmp.ge.s32.totalorder %s12, 18
      %s19 = sphi 0, %s31
      %s20 = sphi 0, %s27
      %s21 = sphi 0, %s19
      %s22 = sphi 0, %s20
      %s23 = sphi 0, %s21
      %s24 = sphi 0, %s22
      %s36 = sphi 0, %s38
      %s39 = sphi 0, %s36
      %s40 = sphi 0, %s39
      %s56 = sphi 0, %s40
      %s60 = sphi 0, %s60
      %s62 = sphi 0, %s60
      %s63 = sphi 0, %s62
      %s77 = sphi 0, %s63
      %s81 = sphi 0, %s81
      %s83 = sphi 0, %s81
      %s84 = sphi 0, %s83
      %s98 = sphi 0, %s84
      %s104 = sphi 0, %s106
      %s107 = sphi 0, %s104
      %s108 = sphi 0, %s107
      %s124 = sphi 0, %s108
    $region4: #{tpu_custom_call.1} parent=1 // loop_header_branch
      %15 = sbr.rel (%p13) target = $region8
    $region5: #{tpu_custom_call.1} parent=1 // loop_body
      %s17 = ssub.s32 %s12, 1
      %s18 = ssub.s32 %s12, 2
      %s25 = sadd.s32 1, %s20
      %p26 = scmp.ge.s32.totalorder %s25, 1
      %s27 = scalar_select %p26, 0, %s25
      %s28 = sadd.s32 1, %s19
      %s29 = scalar_select %p26, %s28, %s19
      %p30 = scmp.ge.s32.totalorder %s29, 16
      %s31 = scalar_select %p30, 0, %s29
      %s32 = ssub.s32 %s19, %s31
      %s33 = ssub.s32 %s20, %s27
      %s34 = sor.u32 %s32, %s33
      %p35 = scmp.eq.s32.totalorder %s34, 0
      %s37 = sadd.s32 %s36, 1
      %s38 = scalar_select %p35, %s36, %s37
      %p41 = pneg %p35
      %p42 = scmp.eq.s32.totalorder %s12, 15
      %p43 = por %p41, %p42
      %p44 = scmp.ne.s32.totalorder %s36, %s39
      %p45 = scmp.eq.s32.totalorder %s12, 0
      %p46 = por %p44, %p45
      %p47 = scmp.ne.s32.totalorder %s36, %s39
      %p48 = scmp.eq.s32.totalorder %s17, 15
      %p49 = por %p47, %p48
      %p50 = scmp.ne.s32.totalorder %s39, %s40
      %p51 = scmp.eq.s32.totalorder %s17, 0
      %p52 = por %p50, %p51
      %p53 = scmp.ne.s32.totalorder %s39, %s40
      %p54 = scmp.eq.s32.totalorder %s18, 15
      %p55 = por %p53, %p54
      %p57 = scmp.ne.s32.totalorder %s40, %s56
      %p58 = scmp.eq.s32.totalorder %s18, 0
      %p59 = por %p57, %p58
      %s61 = sadd.s32 %s60, 1
      %p64 = scmp.eq.s32.totalorder %s12, 15
      %p65 = scmp.ne.s32.totalorder %s60, %s62
      %p66 = scmp.eq.s32.totalorder %s12, 0
      %p67 = por %p65, %p66
      %p68 = scmp.ne.s32.totalorder %s60, %s62
      %p69 = scmp.eq.s32.totalorder %s17, 15
      %p70 = por %p68, %p69
      %p71 = scmp.ne.s32.totalorder %s62, %s63
      %p72 = scmp.eq.s32.totalorder %s17, 0
      %p73 = por %p71, %p72
      %p74 = scmp.ne.s32.totalorder %s62, %s63
      %p75 = scmp.eq.s32.totalorder %s18, 15
      %p76 = por %p74, %p75
      %p78 = scmp.ne.s32.totalorder %s63, %s77
      %p79 = scmp.eq.s32.totalorder %s18, 0
      %p80 = por %p78, %p79
      %s82 = sadd.s32 %s81, 1
      %p85 = scmp.eq.s32.totalorder %s12, 15
      %p86 = scmp.ne.s32.totalorder %s81, %s83
      %p87 = scmp.eq.s32.totalorder %s12, 0
      %p88 = por %p86, %p87
      %p89 = scmp.ne.s32.totalorder %s81, %s83
      %p90 = scmp.eq.s32.totalorder %s17, 15
      %p91 = por %p89, %p90
      %p92 = scmp.ne.s32.totalorder %s83, %s84
      %p93 = scmp.eq.s32.totalorder %s17, 0
      %p94 = por %p92, %p93
      %p95 = scmp.ne.s32.totalorder %s83, %s84
      %p96 = scmp.eq.s32.totalorder %s18, 15
      %p97 = por %p95, %p96
      %p99 = scmp.ne.s32.totalorder %s84, %s98
      %p100 = scmp.eq.s32.totalorder %s18, 0
      %p101 = por %p99, %p100
      %s102 = ssub.s32 %s19, %s31
      %p103 = scmp.eq.s32.totalorder %s102, 0
      %s105 = sadd.s32 %s104, 1
      %s106 = scalar_select %p103, %s104, %s105
      %p109 = pneg %p103
      %p110 = scmp.eq.s32.totalorder %s12, 15
      %p111 = por %p109, %p110
      %p112 = scmp.ne.s32.totalorder %s104, %s107
      %p113 = scmp.eq.s32.totalorder %s12, 0
      %p114 = por %p112, %p113
      %p115 = scmp.ne.s32.totalorder %s104, %s107
      %p116 = scmp.eq.s32.totalorder %s17, 15
      %p117 = por %p115, %p116
      %p118 = scmp.ne.s32.totalorder %s107, %s108
      %p119 = scmp.eq.s32.totalorder %s17, 0
      %p120 = por %p118, %p119
      %p121 = scmp.ne.s32.totalorder %s107, %s108
      %p122 = scmp.eq.s32.totalorder %s18, 15
      %p123 = por %p121, %p122
      %p125 = scmp.ne.s32.totalorder %s108, %s124
      %p126 = scmp.eq.s32.totalorder %s18, 0
      %p127 = por %p125, %p126
      %p128 = scmp.le.s32.totalorder 1, %s12
      %p129 = scmp.lt.s32.totalorder %s12, 17
      %p130 = pnand %p128, %p129
      %p131 = pneg %p130
      // Predicated region
      $region9: #{tpu_custom_call.1} parent=5 // pred_check
        _
      $region10: #{tpu_custom_call.1} parent=5 // pred_check_branch
        %133 = sbr.rel (%p130) target = $region12
      $region11: #{tpu_custom_call.1} parent=5 // pred_region
        %s134 = ssub.s32 %s12, 1
        // Predicated region
        $region13: #{tpu_custom_call.1} parent=11 // pred_check
          %p135 = pneg %p73
        $region14: #{tpu_custom_call.1} parent=11 // pred_check_branch
          %137 = sbr.rel (%p135) target = $region16
        $region15: #{tpu_custom_call.1} parent=11 // pred_region
          _
        $region16: #{tpu_custom_call.1} parent=11 // pred_fallthru
          _
        // Predicated region
        $region17: #{tpu_custom_call.1} parent=11 // pred_check
          %p138 = pneg %p94
        $region18: #{tpu_custom_call.1} parent=11 // pred_check_branch
          %140 = sbr.rel (%p138) target = $region20
        $region19: #{tpu_custom_call.1} parent=11 // pred_region
          _
        $region20: #{tpu_custom_call.1} parent=11 // pred_fallthru
          _
      $region12: #{tpu_custom_call.1} parent=5 // pred_fallthru
        _
      %p141 = scmp.lt.s32.totalorder %s12, 16
      // Predicated region
      $region21: #{tpu_custom_call.1} parent=5 // pred_check
        %p142 = pneg %p141
      $region22: #{tpu_custom_call.1} parent=5 // pred_check_branch
        %144 = sbr.rel (%p142) target = $region24
      $region23: #{tpu_custom_call.1} parent=5 // pred_region
        // Predicated region
        $region25: #{tpu_custom_call.1} parent=23 // pred_check
          %p145 = pneg %p46
        $region26: #{tpu_custom_call.1} parent=23 // pred_check_branch
          %147 = sbr.rel (%p145) target = $region28
        $region27: #{tpu_custom_call.1} parent=23 // pred_region
          %s148 = sand.u32 %s36, 1
          %s149 = scalar_lea.sflag [#allocation4], %s148
          %s150 = sand.u32 %s36, 1
          %s151 = smul.addr %s150, 8
          %s152 = scalar_lea.vmem [#allocation3], %s151
          %s154 = ssub.s32 128, 128
          %155 = vsyncadd %s149, %s154
          %s156 = sadd.s32 %s20, %s19
          %s157 = smul.addr %s156, 128
          %s158 = scalar_lea.hbm %s0, %s157
          %s160 = sshll.u32 %s152, 4
          %s161 = int_to_ptr.vmem [resolvable:$true] %s160
          %163 = dma.hbm_to_vmem [thread:$0]  %s158, 128, %s161, %s149
        $region28: #{tpu_custom_call.1} parent=23 // pred_fallthru
          _
      $region24: #{tpu_custom_call.1} parent=5 // pred_fallthru
        _
      %p164 = scmp.le.s32.totalorder 1, %s12
      %p165 = scmp.lt.s32.totalorder %s12, 17
      %p166 = pnand %p164, %p165
      %p167 = pneg %p166
      // Predicated region
      $region29: #{tpu_custom_call.1} parent=5 // pred_check
        _
      $region30: #{tpu_custom_call.1} parent=5 // pred_check_branch
        %169 = sbr.rel (%p166) target = $region32
      $region31: #{tpu_custom_call.1} parent=5 // pred_region
        %s170 = ssub.s32 %s12, 1
        %s171 = sand.u32 %s39, 1
        %s172 = scalar_lea.sflag [#allocation4], %s171
        %s173 = sand.u32 %s39, 1
        %s174 = smul.addr %s173, 8
        %s175 = scalar_lea.vmem [#allocation3], %s174
        // Predicated region
        $region33: #{tpu_custom_call.1} parent=31 // pred_check
          %p176 = pneg %p52
        $region34: #{tpu_custom_call.1} parent=31 // pred_check_branch
          %178 = sbr.rel (%p176) target = $region36
        $region35: #{tpu_custom_call.1} parent=31 // pred_region
          %179 = dma.done %s172, 128
        $region36: #{tpu_custom_call.1} parent=31 // pred_fallthru
          _
        %s180 = sand.u32 %s39, 1
        %s181 = scalar_lea.sflag [#allocation4], %s180
        %s182 = sand.u32 %s39, 1
        %s183 = smul.addr %s182, 8
        %s184 = scalar_lea.vmem [#allocation3], %s183
        %p185 = pneg %p52
        %p186 = pneg %p49
        %p187 = pneg %p73
        %p188 = pneg %p70
        %p189 = pneg %p94
        %p190 = pneg %p91
        %p191 = pneg %p120
        %p192 = pneg %p117
        %p193 = scmp.lt.s32.totalorder %s21, 15
        %s194 = scalar_select %p193, %s21, 15
        %s195 = scalar_lea.vmem %s3, %s194
        %p196 = scmp.lt.s32.totalorder %s21, 15
        %s197 = scalar_select %p196, %s21, 15
        %s198 = scalar_lea.vmem %s3, %s197
        %p199 = scmp.eq.s32.totalorder %s22, 0
        // Predicated region
        $region37: #{tpu_custom_call.1} parent=31 // pred_check
          %p200 = pneg %p199
        $region38: #{tpu_custom_call.1} parent=31 // pred_check_branch
          %202 = sbr.rel (%p200) target = $region40
        $region39: #{tpu_custom_call.1} parent=31 // pred_region
          %203 = vst [vmem:[#allocation2] sm:$0xff] 0.0
          %204 = vst [vmem:[#allocation2 + $0x8] sm:$0xff] 0.0
          %205 = vst [vmem:[#allocation2 + $0x10] sm:$0xff] 0.0
          %206 = vst [vmem:[#allocation2 + $0x18] sm:$0xff] 0.0
          %207 = vst [vmem:[#allocation2 + $0x20] sm:$0xff] 0.0
          %208 = vst [vmem:[#allocation2 + $0x28] sm:$0xff] 0.0
          %209 = vst [vmem:[#allocation2 + $0x30] sm:$0xff] 0.0
          %210 = vst [vmem:[#allocation2 + $0x38] sm:$0xff] 0.0
          %211 = vst [vmem:[#allocation2 + $0x40] sm:$0xff] 0.0
          %212 = vst [vmem:[#allocation2 + $0x48] sm:$0xff] 0.0
          %213 = vst [vmem:[#allocation2 + $0x50] sm:$0xff] 0.0
          %214 = vst [vmem:[#allocation2 + $0x58] sm:$0xff] 0.0
          %215 = vst [vmem:[#allocation2 + $0x60] sm:$0xff] 0.0
        $region40: #{tpu_custom_call.1} parent=31 // pred_fallthru
          _
        %v216 = vlaneseq
        %v217 = vshrl.u32 %v216, 7
        %v218 = vadd.s32 %v217, 8
        %v219 = vadd.s32 %v217, 16
        %v220 = vadd.s32 %v217, 24
        %v221 = vadd.s32 %v217, 32
        %v222 = vadd.s32 %v217, 40
        %v223 = vadd.s32 %v217, 48
        %v224 = vadd.s32 %v217, 56
        %v225 = vadd.s32 %v217, 64
        %v226 = vadd.s32 %v217, 72
        %v227 = vadd.s32 %v217, 80
        %v228 = vadd.s32 %v217, 88
        %v229 = vadd.s32 %v217, 96
        %v230 = vld [vmem:[#allocation2] sm:$0xff]
        %v231 = vld [vmem:[#allocation2 + $0x8] sm:$0xff]
        %v232 = vld [vmem:[#allocation2 + $0x10] sm:$0xff]
        %v233 = vld [vmem:[#allocation2 + $0x18] sm:$0xff]
        %v234 = vld [vmem:[#allocation2 + $0x20] sm:$0xff]
        %v235 = vld [vmem:[#allocation2 + $0x28] sm:$0xff]
        %v236 = vld [vmem:[#allocation2 + $0x30] sm:$0xff]
        %v237 = vld [vmem:[#allocation2 + $0x38] sm:$0xff]
        %v238 = vld [vmem:[#allocation2 + $0x40] sm:$0xff]
        %v239 = vld [vmem:[#allocation2 + $0x48] sm:$0xff]
        %v240 = vld [vmem:[#allocation2 + $0x50] sm:$0xff]
        %v241 = vld [vmem:[#allocation2 + $0x58] sm:$0xff]
        %v242 = vld [vmem:[#allocation2 + $0x60] sm:$0xff]
        %v243 = vld [vmem:[%s175] sm:$0x1]
        %v244 = vlaneseq
        %v245 = vshrl.u32 %v244, 7
        %v246 = vsub.s32 0, %v245
        %v247 = vrot.slane %v243, %v246
        %vm248 = vcmp.eq.s32.totalorder %v247, %v217
        %vm249 = vcmp.eq.s32.totalorder %v247, %v218
        %vm250 = vcmp.eq.s32.totalorder %v247, %v219
        %vm251 = vcmp.eq.s32.totalorder %v247, %v220
        %vm252 = vcmp.eq.s32.totalorder %v247, %v221
        %vm253 = vcmp.eq.s32.totalorder %v247, %v222
        %vm254 = vcmp.eq.s32.totalorder %v247, %v223
        %vm255 = vcmp.eq.s32.totalorder %v247, %v224
        %vm256 = vcmp.eq.s32.totalorder %v247, %v225
        %vm257 = vcmp.eq.s32.totalorder %v247, %v226
        %vm258 = vcmp.eq.s32.totalorder %v247, %v227
        %vm259 = vcmp.eq.s32.totalorder %v247, %v228
        %vm260 = vcmp.eq.s32.totalorder %v247, %v229
        %v261 = vsel %vm248, 1, 0
        %v262 = vsel %vm249, 1, 0
        %v263 = vsel %vm250, 1, 0
        %v264 = vsel %vm251, 1, 0
        %v265 = vsel %vm252, 1, 0
        %v266 = vsel %vm253, 1, 0
        %v267 = vsel %vm254, 1, 0
        %v268 = vsel %vm255, 1, 0
        %v269 = vsel %vm256, 1, 0
        %v270 = vsel %vm257, 1, 0
        %v271 = vsel %vm258, 1, 0
        %v272 = vsel %vm259, 1, 0
        %v273 = vsel %vm260, 1, 0
        %v274 = vcvt.s32.f32 %v261
        %v275 = vcvt.s32.f32 %v262
        %v276 = vcvt.s32.f32 %v263
        %v277 = vcvt.s32.f32 %v264
        %v278 = vcvt.s32.f32 %v265
        %v279 = vcvt.s32.f32 %v266
        %v280 = vcvt.s32.f32 %v267
        %v281 = vcvt.s32.f32 %v268
        %v282 = vcvt.s32.f32 %v269
        %v283 = vcvt.s32.f32 %v270
        %v284 = vcvt.s32.f32 %v271
        %v285 = vcvt.s32.f32 %v272
        %v286 = vcvt.s32.f32 %v273
        %v287 = vadd.f32 %v230, %v274
        %v288 = vadd.f32 %v231, %v275
        %v289 = vadd.f32 %v232, %v276
        %v290 = vadd.f32 %v233, %v277
        %v291 = vadd.f32 %v234, %v278
        %v292 = vadd.f32 %v235, %v279
        %v293 = vadd.f32 %v236, %v280
        %v294 = vadd.f32 %v237, %v281
        %v295 = vadd.f32 %v238, %v282
        %v296 = vadd.f32 %v239, %v283
        %v297 = vadd.f32 %v240, %v284
        %v298 = vadd.f32 %v241, %v285
        %v299 = vadd.f32 %v242, %v286
        %v300 = vld [vmem:[%s175 + $0x1] sm:$0x1]
        %v301 = vlaneseq
        %v302 = vshrl.u32 %v301, 7
        %v303 = vsub.s32 0, %v302
        %v304 = vrot.slane %v300, %v303
        %vm305 = vcmp.eq.s32.totalorder %v304, %v217
        %vm306 = vcmp.eq.s32.totalorder %v304, %v218
        %vm307 = vcmp.eq.s32.totalorder %v304, %v219
        %vm308 = vcmp.eq.s32.totalorder %v304, %v220
        %vm309 = vcmp.eq.s32.totalorder %v304, %v221
        %vm310 = vcmp.eq.s32.totalorder %v304, %v222
        %vm311 = vcmp.eq.s32.totalorder %v304, %v223
        %vm312 = vcmp.eq.s32.totalorder %v304, %v224
        %vm313 = vcmp.eq.s32.totalorder %v304, %v225
        %vm314 = vcmp.eq.s32.totalorder %v304, %v226
        %vm315 = vcmp.eq.s32.totalorder %v304, %v227
        %vm316 = vcmp.eq.s32.totalorder %v304, %v228
        %vm317 = vcmp.eq.s32.totalorder %v304, %v229
        %v318 = vsel %vm305, 1, 0
        %v319 = vsel %vm306, 1, 0
        %v320 = vsel %vm307, 1, 0
        %v321 = vsel %vm308, 1, 0
        %v322 = vsel %vm309, 1, 0
        %v323 = vsel %vm310, 1, 0
        %v324 = vsel %vm311, 1, 0
        %v325 = vsel %vm312, 1, 0
        %v326 = vsel %vm313, 1, 0
        %v327 = vsel %vm314, 1, 0
        %v328 = vsel %vm315, 1, 0
        %v329 = vsel %vm316, 1, 0
        %v330 = vsel %vm317, 1, 0
        %v331 = vcvt.s32.f32 %v318
        %v332 = vcvt.s32.f32 %v319
        %v333 = vcvt.s32.f32 %v320
        %v334 = vcvt.s32.f32 %v321
        %v335 = vcvt.s32.f32 %v322
        %v336 = vcvt.s32.f32 %v323
        %v337 = vcvt.s32.f32 %v324
        %v338 = vcvt.s32.f32 %v325
        %v339 = vcvt.s32.f32 %v326
        %v340 = vcvt.s32.f32 %v327
        %v341 = vcvt.s32.f32 %v328
        %v342 = vcvt.s32.f32 %v329
        %v343 = vcvt.s32.f32 %v330
        %v344 = vadd.f32 %v287, %v331
        %v345 = vadd.f32 %v288, %v332
        %v346 = vadd.f32 %v289, %v333
        %v347 = vadd.f32 %v290, %v334
        %v348 = vadd.f32 %v291, %v335
        %v349 = vadd.f32 %v292, %v336
        %v350 = vadd.f32 %v293, %v337
        %v351 = vadd.f32 %v294, %v338
        %v352 = vadd.f32 %v295, %v339
        %v353 = vadd.f32 %v296, %v340
        %v354 = vadd.f32 %v297, %v341
        %v355 = vadd.f32 %v298, %v342
        %v356 = vadd.f32 %v299, %v343
        %v357 = vld [vmem:[%s175 + $0x2] sm:$0x1]
        %v358 = vlaneseq
        %v359 = vshrl.u32 %v358, 7
        %v360 = vsub.s32 0, %v359
        %v361 = vrot.slane %v357, %v360
        %vm362 = vcmp.eq.s32.totalorder %v361, %v217
        %vm363 = vcmp.eq.s32.totalorder %v361, %v218
        %vm364 = vcmp.eq.s32.totalorder %v361, %v219
        %vm365 = vcmp.eq.s32.totalorder %v361, %v220
        %vm366 = vcmp.eq.s32.totalorder %v361, %v221
        %vm367 = vcmp.eq.s32.totalorder %v361, %v222
        %vm368 = vcmp.eq.s32.totalorder %v361, %v223
        %vm369 = vcmp.eq.s32.totalorder %v361, %v224
        %vm370 = vcmp.eq.s32.totalorder %v361, %v225
        %vm371 = vcmp.eq.s32.totalorder %v361, %v226
        %vm372 = vcmp.eq.s32.totalorder %v361, %v227
        %vm373 = vcmp.eq.s32.totalorder %v361, %v228
        %vm374 = vcmp.eq.s32.totalorder %v361, %v229
        %v375 = vsel %vm362, 1, 0
        %v376 = vsel %vm363, 1, 0
        %v377 = vsel %vm364, 1, 0
        %v378 = vsel %vm365, 1, 0
        %v379 = vsel %vm366, 1, 0
        %v380 = vsel %vm367, 1, 0
        %v381 = vsel %vm368, 1, 0
        %v382 = vsel %vm369, 1, 0
        %v383 = vsel %vm370, 1, 0
        %v384 = vsel %vm371, 1, 0
        %v385 = vsel %vm372, 1, 0
        %v386 = vsel %vm373, 1, 0
        %v387 = vsel %vm374, 1, 0
        %v388 = vcvt.s32.f32 %v375
        %v389 = vcvt.s32.f32 %v376
        %v390 = vcvt.s32.f32 %v377
        %v391 = vcvt.s32.f32 %v378
        %v392 = vcvt.s32.f32 %v379
        %v393 = vcvt.s32.f32 %v380
        %v394 = vcvt.s32.f32 %v381
        %v395 = vcvt.s32.f32 %v382
        %v396 = vcvt.s32.f32 %v383
        %v397 = vcvt.s32.f32 %v384
        %v398 = vcvt.s32.f32 %v385
        %v399 = vcvt.s32.f32 %v386
        %v400 = vcvt.s32.f32 %v387
        %v401 = vadd.f32 %v344, %v388
        %v402 = vadd.f32 %v345, %v389
        %v403 = vadd.f32 %v346, %v390
        %v404 = vadd.f32 %v347, %v391
        %v405 = vadd.f32 %v348, %v392
        %v406 = vadd.f32 %v349, %v393
        %v407 = vadd.f32 %v350, %v394
        %v408 = vadd.f32 %v351, %v395
        %v409 = vadd.f32 %v352, %v396
        %v410 = vadd.f32 %v353, %v397
        %v411 = vadd.f32 %v354, %v398
        %v412 = vadd.f32 %v355, %v399
        %v413 = vadd.f32 %v356, %v400
        %v414 = vld [vmem:[%s175 + $0x3] sm:$0x1]
        %v415 = vlaneseq
        %v416 = vshrl.u32 %v415, 7
        %v417 = vsub.s32 0, %v416
        %v418 = vrot.slane %v414, %v417
        %vm419 = vcmp.eq.s32.totalorder %v418, %v217
        %vm420 = vcmp.eq.s32.totalorder %v418, %v218
        %vm421 = vcmp.eq.s32.totalorder %v418, %v219
        %vm422 = vcmp.eq.s32.totalorder %v418, %v220
        %vm423 = vcmp.eq.s32.totalorder %v418, %v221
        %vm424 = vcmp.eq.s32.totalorder %v418, %v222
        %vm425 = vcmp.eq.s32.totalorder %v418, %v223
        %vm426 = vcmp.eq.s32.totalorder %v418, %v224
        %vm427 = vcmp.eq.s32.totalorder %v418, %v225
        %vm428 = vcmp.eq.s32.totalorder %v418, %v226
        %vm429 = vcmp.eq.s32.totalorder %v418, %v227
        %vm430 = vcmp.eq.s32.totalorder %v418, %v228
        %vm431 = vcmp.eq.s32.totalorder %v418, %v229
        %v432 = vsel %vm419, 1, 0
        %v433 = vsel %vm420, 1, 0
        %v434 = vsel %vm421, 1, 0
        %v435 = vsel %vm422, 1, 0
        %v436 = vsel %vm423, 1, 0
        %v437 = vsel %vm424, 1, 0
        %v438 = vsel %vm425, 1, 0
        %v439 = vsel %vm426, 1, 0
        %v440 = vsel %vm427, 1, 0
        %v441 = vsel %vm428, 1, 0
        %v442 = vsel %vm429, 1, 0
        %v443 = vsel %vm430, 1, 0
        %v444 = vsel %vm431, 1, 0
        %v445 = vcvt.s32.f32 %v432
        %v446 = vcvt.s32.f32 %v433
        %v447 = vcvt.s32.f32 %v434
        %v448 = vcvt.s32.f32 %v435
        %v449 = vcvt.s32.f32 %v436
        %v450 = vcvt.s32.f32 %v437
        %v451 = vcvt.s32.f32 %v438
        %v452 = vcvt.s32.f32 %v439
        %v453 = vcvt.s32.f32 %v440
        %v454 = vcvt.s32.f32 %v441
        %v455 = vcvt.s32.f32 %v442
        %v456 = vcvt.s32.f32 %v443
        %v457 = vcvt.s32.f32 %v444
        %v458 = vadd.f32 %v401, %v445
        %v459 = vadd.f32 %v402, %v446
        %v460 = vadd.f32 %v403, %v447
        %v461 = vadd.f32 %v404, %v448
        %v462 = vadd.f32 %v405, %v449
        %v463 = vadd.f32 %v406, %v450
        %v464 = vadd.f32 %v407, %v451
        %v465 = vadd.f32 %v408, %v452
        %v466 = vadd.f32 %v409, %v453
        %v467 = vadd.f32 %v410, %v454
        %v468 = vadd.f32 %v411, %v455
        %v469 = vadd.f32 %v412, %v456
        %v470 = vadd.f32 %v413, %v457
        %v471 = vld [vmem:[%s175 + $0x4] sm:$0x1]
        %v472 = vlaneseq
        %v473 = vshrl.u32 %v472, 7
        %v474 = vsub.s32 0, %v473
        %v475 = vrot.slane %v471, %v474
        %vm476 = vcmp.eq.s32.totalorder %v475, %v217
        %vm477 = vcmp.eq.s32.totalorder %v475, %v218
        %vm478 = vcmp.eq.s32.totalorder %v475, %v219
        %vm479 = vcmp.eq.s32.totalorder %v475, %v220
        %vm480 = vcmp.eq.s32.totalorder %v475, %v221
        %vm481 = vcmp.eq.s32.totalorder %v475, %v222
        %vm482 = vcmp.eq.s32.totalorder %v475, %v223
        %vm483 = vcmp.eq.s32.totalorder %v475, %v224
        %vm484 = vcmp.eq.s32.totalorder %v475, %v225
        %vm485 = vcmp.eq.s32.totalorder %v475, %v226
        %vm486 = vcmp.eq.s32.totalorder %v475, %v227
        %vm487 = vcmp.eq.s32.totalorder %v475, %v228
        %vm488 = vcmp.eq.s32.totalorder %v475, %v229
        %v489 = vsel %vm476, 1, 0
        %v490 = vsel %vm477, 1, 0
        %v491 = vsel %vm478, 1, 0
        %v492 = vsel %vm479, 1, 0
        %v493 = vsel %vm480, 1, 0
        %v494 = vsel %vm481, 1, 0
        %v495 = vsel %vm482, 1, 0
        %v496 = vsel %vm483, 1, 0
        %v497 = vsel %vm484, 1, 0
        %v498 = vsel %vm485, 1, 0
        %v499 = vsel %vm486, 1, 0
        %v500 = vsel %vm487, 1, 0
        %v501 = vsel %vm488, 1, 0
        %v502 = vcvt.s32.f32 %v489
        %v503 = vcvt.s32.f32 %v490
        %v504 = vcvt.s32.f32 %v491
        %v505 = vcvt.s32.f32 %v492
        %v506 = vcvt.s32.f32 %v493
        %v507 = vcvt.s32.f32 %v494
        %v508 = vcvt.s32.f32 %v495
        %v509 = vcvt.s32.f32 %v496
        %v510 = vcvt.s32.f32 %v497
        %v511 = vcvt.s32.f32 %v498
        %v512 = vcvt.s32.f32 %v499
        %v513 = vcvt.s32.f32 %v500
        %v514 = vcvt.s32.f32 %v501
        %v515 = vadd.f32 %v458, %v502
        %v516 = vadd.f32 %v459, %v503
        %v517 = vadd.f32 %v460, %v504
        %v518 = vadd.f32 %v461, %v505
        %v519 = vadd.f32 %v462, %v506
        %v520 = vadd.f32 %v463, %v507
        %v521 = vadd.f32 %v464, %v508
        %v522 = vadd.f32 %v465, %v509
        %v523 = vadd.f32 %v466, %v510
        %v524 = vadd.f32 %v467, %v511
        %v525 = vadd.f32 %v468, %v512
        %v526 = vadd.f32 %v469, %v513
        %v527 = vadd.f32 %v470, %v514
        %v528 = vld [vmem:[%s175 + $0x5] sm:$0x1]
        %v529 = vlaneseq
        %v530 = vshrl.u32 %v529, 7
        %v531 = vsub.s32 0, %v530
        %v532 = vrot.slane %v528, %v531
        %vm533 = vcmp.eq.s32.totalorder %v532, %v217
        %vm534 = vcmp.eq.s32.totalorder %v532, %v218
        %vm535 = vcmp.eq.s32.totalorder %v532, %v219
        %vm536 = vcmp.eq.s32.totalorder %v532, %v220
        %vm537 = vcmp.eq.s32.totalorder %v532, %v221
        %vm538 = vcmp.eq.s32.totalorder %v532, %v222
        %vm539 = vcmp.eq.s32.totalorder %v532, %v223
        %vm540 = vcmp.eq.s32.totalorder %v532, %v224
        %vm541 = vcmp.eq.s32.totalorder %v532, %v225
        %vm542 = vcmp.eq.s32.totalorder %v532, %v226
        %vm543 = vcmp.eq.s32.totalorder %v532, %v227
        %vm544 = vcmp.eq.s32.totalorder %v532, %v228
        %vm545 = vcmp.eq.s32.totalorder %v532, %v229
        %v546 = vsel %vm533, 1, 0
        %v547 = vsel %vm534, 1, 0
        %v548 = vsel %vm535, 1, 0
        %v549 = vsel %vm536, 1, 0
        %v550 = vsel %vm537, 1, 0
        %v551 = vsel %vm538, 1, 0
        %v552 = vsel %vm539, 1, 0
        %v553 = vsel %vm540, 1, 0
        %v554 = vsel %vm541, 1, 0
        %v555 = vsel %vm542, 1, 0
        %v556 = vsel %vm543, 1, 0
        %v557 = vsel %vm544, 1, 0
        %v558 = vsel %vm545, 1, 0
        %v559 = vcvt.s32.f32 %v546
        %v560 = vcvt.s32.f32 %v547
        %v561 = vcvt.s32.f32 %v548
        %v562 = vcvt.s32.f32 %v549
        %v563 = vcvt.s32.f32 %v550
        %v564 = vcvt.s32.f32 %v551
        %v565 = vcvt.s32.f32 %v552
        %v566 = vcvt.s32.f32 %v553
        %v567 = vcvt.s32.f32 %v554
        %v568 = vcvt.s32.f32 %v555
        %v569 = vcvt.s32.f32 %v556
        %v570 = vcvt.s32.f32 %v557
        %v571 = vcvt.s32.f32 %v558
        %v572 = vadd.f32 %v515, %v559
        %v573 = vadd.f32 %v516, %v560
        %v574 = vadd.f32 %v517, %v561
        %v575 = vadd.f32 %v518, %v562
        %v576 = vadd.f32 %v519, %v563
        %v577 = vadd.f32 %v520, %v564
        %v578 = vadd.f32 %v521, %v565
        %v579 = vadd.f32 %v522, %v566
        %v580 = vadd.f32 %v523, %v567
        %v581 = vadd.f32 %v524, %v568
        %v582 = vadd.f32 %v525, %v569
        %v583 = vadd.f32 %v526, %v570
        %v584 = vadd.f32 %v527, %v571
        %v585 = vld [vmem:[%s175 + $0x6] sm:$0x1]
        %v586 = vlaneseq
        %v587 = vshrl.u32 %v586, 7
        %v588 = vsub.s32 0, %v587
        %v589 = vrot.slane %v585, %v588
        %vm590 = vcmp.eq.s32.totalorder %v589, %v217
        %vm591 = vcmp.eq.s32.totalorder %v589, %v218
        %vm592 = vcmp.eq.s32.totalorder %v589, %v219
        %vm593 = vcmp.eq.s32.totalorder %v589, %v220
        %vm594 = vcmp.eq.s32.totalorder %v589, %v221
        %vm595 = vcmp.eq.s32.totalorder %v589, %v222
        %vm596 = vcmp.eq.s32.totalorder %v589, %v223
        %vm597 = vcmp.eq.s32.totalorder %v589, %v224
        %vm598 = vcmp.eq.s32.totalorder %v589, %v225
        %vm599 = vcmp.eq.s32.totalorder %v589, %v226
        %vm600 = vcmp.eq.s32.totalorder %v589, %v227
        %vm601 = vcmp.eq.s32.totalorder %v589, %v228
        %vm602 = vcmp.eq.s32.totalorder %v589, %v229
        %v603 = vsel %vm590, 1, 0
        %v604 = vsel %vm591, 1, 0
        %v605 = vsel %vm592, 1, 0
        %v606 = vsel %vm593, 1, 0
        %v607 = vsel %vm594, 1, 0
        %v608 = vsel %vm595, 1, 0
        %v609 = vsel %vm596, 1, 0
        %v610 = vsel %vm597, 1, 0
        %v611 = vsel %vm598, 1, 0
        %v612 = vsel %vm599, 1, 0
        %v613 = vsel %vm600, 1, 0
        %v614 = vsel %vm601, 1, 0
        %v615 = vsel %vm602, 1, 0
        %v616 = vcvt.s32.f32 %v603
        %v617 = vcvt.s32.f32 %v604
        %v618 = vcvt.s32.f32 %v605
        %v619 = vcvt.s32.f32 %v606
        %v620 = vcvt.s32.f32 %v607
        %v621 = vcvt.s32.f32 %v608
        %v622 = vcvt.s32.f32 %v609
        %v623 = vcvt.s32.f32 %v610
        %v624 = vcvt.s32.f32 %v611
        %v625 = vcvt.s32.f32 %v612
        %v626 = vcvt.s32.f32 %v613
        %v627 = vcvt.s32.f32 %v614
        %v628 = vcvt.s32.f32 %v615
        %v629 = vadd.f32 %v572, %v616
        %v630 = vadd.f32 %v573, %v617
        %v631 = vadd.f32 %v574, %v618
        %v632 = vadd.f32 %v575, %v619
        %v633 = vadd.f32 %v576, %v620
        %v634 = vadd.f32 %v577, %v621
        %v635 = vadd.f32 %v578, %v622
        %v636 = vadd.f32 %v579, %v623
        %v637 = vadd.f32 %v580, %v624
        %v638 = vadd.f32 %v581, %v625
        %v639 = vadd.f32 %v582, %v626
        %v640 = vadd.f32 %v583, %v627
        %v641 = vadd.f32 %v584, %v628
        %v642 = vld [vmem:[%s175 + $0x7] sm:$0x1]
        %v643 = vlaneseq
        %v644 = vshrl.u32 %v643, 7
        %v645 = vsub.s32 0, %v644
        %v646 = vrot.slane %v642, %v645
        %vm647 = vcmp.eq.s32.totalorder %v646, %v217
        %vm648 = vcmp.eq.s32.totalorder %v646, %v218
        %vm649 = vcmp.eq.s32.totalorder %v646, %v219
        %vm650 = vcmp.eq.s32.totalorder %v646, %v220
        %vm651 = vcmp.eq.s32.totalorder %v646, %v221
        %vm652 = vcmp.eq.s32.totalorder %v646, %v222
        %vm653 = vcmp.eq.s32.totalorder %v646, %v223
        %vm654 = vcmp.eq.s32.totalorder %v646, %v224
        %vm655 = vcmp.eq.s32.totalorder %v646, %v225
        %vm656 = vcmp.eq.s32.totalorder %v646, %v226
        %vm657 = vcmp.eq.s32.totalorder %v646, %v227
        %vm658 = vcmp.eq.s32.totalorder %v646, %v228
        %vm659 = vcmp.eq.s32.totalorder %v646, %v229
        %v660 = vsel %vm647, 1, 0
        %v661 = vsel %vm648, 1, 0
        %v662 = vsel %vm649, 1, 0
        %v663 = vsel %vm650, 1, 0
        %v664 = vsel %vm651, 1, 0
        %v665 = vsel %vm652, 1, 0
        %v666 = vsel %vm653, 1, 0
        %v667 = vsel %vm654, 1, 0
        %v668 = vsel %vm655, 1, 0
        %v669 = vsel %vm656, 1, 0
        %v670 = vsel %vm657, 1, 0
        %v671 = vsel %vm658, 1, 0
        %v672 = vsel %vm659, 1, 0
        %v673 = vcvt.s32.f32 %v660
        %v674 = vcvt.s32.f32 %v661
        %v675 = vcvt.s32.f32 %v662
        %v676 = vcvt.s32.f32 %v663
        %v677 = vcvt.s32.f32 %v664
        %v678 = vcvt.s32.f32 %v665
        %v679 = vcvt.s32.f32 %v666
        %v680 = vcvt.s32.f32 %v667
        %v681 = vcvt.s32.f32 %v668
        %v682 = vcvt.s32.f32 %v669
        %v683 = vcvt.s32.f32 %v670
        %v684 = vcvt.s32.f32 %v671
        %v685 = vcvt.s32.f32 %v672
        %v686 = vadd.f32 %v629, %v673
        %v687 = vadd.f32 %v630, %v674
        %v688 = vadd.f32 %v631, %v675
        %v689 = vadd.f32 %v632, %v676
        %v690 = vadd.f32 %v633, %v677
        %v691 = vadd.f32 %v634, %v678
        %v692 = vadd.f32 %v635, %v679
        %v693 = vadd.f32 %v636, %v680
        %v694 = vadd.f32 %v637, %v681
        %v695 = vadd.f32 %v638, %v682
        %v696 = vadd.f32 %v639, %v683
        %v697 = vadd.f32 %v640, %v684
        %v698 = vadd.f32 %v641, %v685
        %699 = vst [vmem:[#allocation2] sm:$0xff] %v686
        %700 = vst [vmem:[#allocation2 + $0x8] sm:$0xff] %v687
        %701 = vst [vmem:[#allocation2 + $0x10] sm:$0xff] %v688
        %702 = vst [vmem:[#allocation2 + $0x18] sm:$0xff] %v689
        %703 = vst [vmem:[#allocation2 + $0x20] sm:$0xff] %v690
        %704 = vst [vmem:[#allocation2 + $0x28] sm:$0xff] %v691
        %705 = vst [vmem:[#allocation2 + $0x30] sm:$0xff] %v692
        %706 = vst [vmem:[#allocation2 + $0x38] sm:$0xff] %v693
        %707 = vst [vmem:[#allocation2 + $0x40] sm:$0xff] %v694
        %708 = vst [vmem:[#allocation2 + $0x48] sm:$0xff] %v695
        %709 = vst [vmem:[#allocation2 + $0x50] sm:$0xff] %v696
        %710 = vst [vmem:[#allocation2 + $0x58] sm:$0xff] %v697
        %711 = vst [vmem:[#allocation2 + $0x60] sm:$0xff] %v698
        // Predicated region
        $region41: #{tpu_custom_call.1} parent=31 // pred_check
          %p712 = pneg %p199
        $region42: #{tpu_custom_call.1} parent=31 // pred_check_branch
          %714 = sbr.rel (%p712) target = $region44
        $region43: #{tpu_custom_call.1} parent=31 // pred_region
          %v715 = vld [vmem:[#allocation2] sm:$0xff]
          %v716 = vld [vmem:[#allocation2 + $0x8] sm:$0xff]
          %v717 = vld [vmem:[#allocation2 + $0x10] sm:$0xff]
          %v718 = vld [vmem:[#allocation2 + $0x18] sm:$0xff]
          %v719 = vld [vmem:[#allocation2 + $0x20] sm:$0xff]
          %v720 = vld [vmem:[#allocation2 + $0x28] sm:$0xff]
          %v721 = vld [vmem:[#allocation2 + $0x30] sm:$0xff]
          %v722 = vld [vmem:[#allocation2 + $0x38] sm:$0xff]
          %v723 = vld [vmem:[#allocation2 + $0x40] sm:$0xff]
          %v724 = vld [vmem:[#allocation2 + $0x48] sm:$0xff]
          %v725 = vld [vmem:[#allocation2 + $0x50] sm:$0xff]
          %v726 = vld [vmem:[#allocation2 + $0x58] sm:$0xff]
          %v727 = vld [vmem:[#allocation2 + $0x60] sm:$0xff]
          %728 = vadd.xlane.f32.xlu0 %v715
          %v729 = vpop.xlane.xlu0 %728
          %730 = vadd.xlane.f32.xlu0 %v716
          %v731 = vpop.xlane.xlu0 %730
          %732 = vadd.xlane.f32.xlu0 %v717
          %v733 = vpop.xlane.xlu0 %732
          %734 = vadd.xlane.f32.xlu0 %v718
          %v735 = vpop.xlane.xlu0 %734
          %736 = vadd.xlane.f32.xlu0 %v719
          %v737 = vpop.xlane.xlu0 %736
          %738 = vadd.xlane.f32.xlu0 %v720
          %v739 = vpop.xlane.xlu0 %738
          %740 = vadd.xlane.f32.xlu0 %v721
          %v741 = vpop.xlane.xlu0 %740
          %742 = vadd.xlane.f32.xlu0 %v722
          %v743 = vpop.xlane.xlu0 %742
          %744 = vadd.xlane.f32.xlu0 %v723
          %v745 = vpop.xlane.xlu0 %744
          %746 = vadd.xlane.f32.xlu0 %v724
          %v747 = vpop.xlane.xlu0 %746
          %748 = vadd.xlane.f32.xlu0 %v725
          %v749 = vpop.xlane.xlu0 %748
          %750 = vadd.xlane.f32.xlu0 %v726
          %v751 = vpop.xlane.xlu0 %750
          %752 = vadd.xlane.f32.xlu0 %v727
          %v753 = vpop.xlane.xlu0 %752
          %v754 = vld [vmem:[%s1] sm:$0xff]
          %v755 = vld [vmem:[%s1 + $0x8] sm:$0xff]
          %v756 = vld [vmem:[%s1 + $0x10] sm:$0xff]
          %v757 = vld [vmem:[%s1 + $0x18] sm:$0xff]
          %v758 = vld [vmem:[%s1 + $0x20] sm:$0xff]
          %v759 = vld [vmem:[%s1 + $0x28] sm:$0xff]
          %v760 = vld [vmem:[%s1 + $0x30] sm:$0xff]
          %v761 = vld [vmem:[%s1 + $0x38] sm:$0xff]
          %v762 = vld [vmem:[%s1 + $0x40] sm:$0xff]
          %v763 = vld [vmem:[%s1 + $0x48] sm:$0xff]
          %v764 = vld [vmem:[%s1 + $0x50] sm:$0xff]
          %v765 = vld [vmem:[%s1 + $0x58] sm:$0xff]
          %v766 = vld [vmem:[%s1 + $0x60] sm:$0xff]
          %v767 = vmul.f32 %v729, %v754
          %v768 = vmul.f32 %v731, %v755
          %v769 = vmul.f32 %v733, %v756
          %v770 = vmul.f32 %v735, %v757
          %v771 = vmul.f32 %v737, %v758
          %v772 = vmul.f32 %v739, %v759
          %v773 = vmul.f32 %v741, %v760
          %v774 = vmul.f32 %v743, %v761
          %v775 = vmul.f32 %v745, %v762
          %v776 = vmul.f32 %v747, %v763
          %v777 = vmul.f32 %v749, %v764
          %v778 = vmul.f32 %v751, %v765
          %v779 = vmul.f32 %v753, %v766
          %vm780 = vcmask 31744
          %v781 = vsel %vm780, %v767, 0.0
          %v782 = vsel %vm780, %v768, 0.0
          %v783 = vadd.f32 %v781, %v782
          %v784 = vsel %vm780, %v769, 0.0
          %v785 = vadd.f32 %v783, %v784
          %v786 = vsel %vm780, %v770, 0.0
          %v787 = vadd.f32 %v785, %v786
          %v788 = vsel %vm780, %v771, 0.0
          %v789 = vadd.f32 %v787, %v788
          %v790 = vsel %vm780, %v772, 0.0
          %v791 = vadd.f32 %v789, %v790
          %v792 = vsel %vm780, %v773, 0.0
          %v793 = vadd.f32 %v791, %v792
          %v794 = vsel %vm780, %v774, 0.0
          %v795 = vadd.f32 %v793, %v794
          %v796 = vsel %vm780, %v775, 0.0
          %v797 = vadd.f32 %v795, %v796
          %v798 = vsel %vm780, %v776, 0.0
          %v799 = vadd.f32 %v797, %v798
          %v800 = vsel %vm780, %v777, 0.0
          %v801 = vadd.f32 %v799, %v800
          %v802 = vsel %vm780, %v778, 0.0
          %v803 = vadd.f32 %v801, %v802
          %v804 = vsel %vm780, %v779, 0.0
          %v805 = vadd.f32 %v803, %v804
          %v806 = vrot.slane %v805, 4
          %v807 = vadd.f32 %v805, %v806
          %v808 = vrot.slane %v807, 2
          %v809 = vadd.f32 %v807, %v808
          %v810 = vrot.slane %v809, 1
          %v811 = vadd.f32 %v809, %v810
          %v812 = vld [vmem:[%s2] sm:$0x1]
          %v813 = vadd.f32 %v811, %v812
          %vm814 = vcmask 24576
          %815 = vst.msk [vmem:[%s198] sm:$0x1] %vm814, %v813
        $region44: #{tpu_custom_call.1} parent=31 // pred_fallthru
          _
        %p816 = scmp.lt.s32.totalorder %s21, 15
        %s817 = scalar_select %p816, %s21, 15
        %s818 = scalar_lea.vmem %s3, %s817
        // Predicated region
        $region45: #{tpu_custom_call.1} parent=31 // pred_check
          %p819 = pneg %p117
        $region46: #{tpu_custom_call.1} parent=31 // pred_check_branch
          %821 = sbr.rel (%p819) target = $region48
        $region47: #{tpu_custom_call.1} parent=31 // pred_region
          _
        $region48: #{tpu_custom_call.1} parent=31 // pred_fallthru
          _
      $region32: #{tpu_custom_call.1} parent=5 // pred_fallthru
        _
      %p822 = scmp.le.s32.totalorder 2, %s12
      // Predicated region
      $region49: #{tpu_custom_call.1} parent=5 // pred_check
        %p823 = pneg %p822
      $region50: #{tpu_custom_call.1} parent=5 // pred_check_branch
        %825 = sbr.rel (%p823) target = $region52
      $region51: #{tpu_custom_call.1} parent=5 // pred_region
        %s826 = ssub.s32 %s12, 2
        // Predicated region
        $region53: #{tpu_custom_call.1} parent=51 // pred_check
          %p827 = pneg %p123
        $region54: #{tpu_custom_call.1} parent=51 // pred_check_branch
          %829 = sbr.rel (%p827) target = $region56
        $region55: #{tpu_custom_call.1} parent=51 // pred_region
          %p830 = scmp.lt.s32.totalorder %s23, 15
          %s831 = scalar_select %p830, %s23, 15
          %s832 = scalar_lea.vmem %s3, %s831
        $region56: #{tpu_custom_call.1} parent=51 // pred_fallthru
          _
      $region52: #{tpu_custom_call.1} parent=5 // pred_fallthru
        _
    $region6: #{tpu_custom_call.1} parent=1 // loop_footer
      %s16 = sadd.s32 1, %s12
    $region7: #{tpu_custom_call.1} parent=1 // loop_footer_branch
      %11 = sbr.rel target = $region3
    $region8: #{tpu_custom_call.1} parent=1 // loop_exit
      _
    %833 = vsyncpa [#allocation4], 1
    %s834 = scalar_lea.sflag [#allocation4], 1
    %835 = vsyncpa %s834, 1

</llo_original>
